<compile_context>
chip_gen: v5e
topology: v5e:2x2
jax: 0.10.0
libtpu: 0.0.40
codegen_flags: <defaults>
</compile_context>

<pallas_src>
import jax
import jax.numpy as jnp
from jax.experimental import pallas as pl
from jax.experimental.pallas import tpu as pltpu


def _rope_kernel(x_ref, cos_ref, sin_ref, o_ref):
    """x_ref / o_ref: (TS, H*D) block of x (interleaved pairs [r0,i0,r1,i1,...]).

    cos_ref / sin_ref: (TS, H*D) f32 coefficient blocks, already expanded to the
    interleaved layout (cos duplicated per pair, sin duplicated with the pair
    sign [-s, +s] baked in).  Then

        out[2j]   = r*cos - i*sin
        out[2j+1] = i*cos + r*sin

    is simply  x*cos_t + partner(x)*sin_t  with partner = swap-within-pair.
    """
    x = x_ref[...].astype(jnp.float32)  # f32 math (matches torch complex64; v5e has no bf16 VPU)
    n = x.shape[-1]
    lane = jax.lax.broadcasted_iota(jnp.int32, x.shape, x.ndim - 1)
    is_even = (lane & 1) == 0
    # partner[k] = x[k+1] on even lanes, x[k-1] on odd lanes (pair swap).
    # pltpu.roll follows np.roll semantics: roll(x, s)[k] == x[(k - s) % n].
    left = pltpu.roll(x, 1, x.ndim - 1)       # x[k-1]
    right = pltpu.roll(x, n - 1, x.ndim - 1)  # x[k+1]
    partner = jnp.where(is_even, right, left)
    o_ref[...] = (x * cos_ref[...] + partner * sin_ref[...]).astype(o_ref.dtype)


def make_freqs_cis(dim: int, end: int, theta: float = 10000.0):
    """Equivalent of RotaryEmbedding.init_rotary_embeddings (buffer setup, plain JAX)."""
    assert dim % 2 == 0
    inv_freq = 1.0 / (theta ** (jnp.arange(0, dim, 2, dtype=jnp.float32)[: dim // 2] / dim))
    t = jnp.arange(end, dtype=jnp.float32)
    angles = jnp.outer(t, inv_freq)            # (end, dim//2)
    return jnp.cos(angles), jnp.sin(angles)    # polar(1, angles) -> (real, imag)


def _choose_seq_tile(S, HD, itemsize, target_bytes=1 << 20):
    """Pick a sequence tile giving ~1 MiB x-blocks (mult. of 8, or the full S)."""
    ts = max(1, target_bytes // max(1, HD * itemsize))
    if ts >= S:
        return S
    ts = max(8, (ts // 8) * 8)
    return min(ts, S)


def rotary_embedding(x, cos_full, sin_full):
    """x: (B, S, H, D).  cos_full/sin_full: (end, D//2) with end >= S."""
    B, S, H, D = x.shape
    assert D % 2 == 0, "inner_dim must be even"
    HD = H * D
    dtype = x.dtype
    itemsize = jnp.dtype(dtype).itemsize

    # ---- free reshape only: keep x's interleaved memory layout --------------
    x2 = x.reshape(B, S, HD)

    # ---- coefficient tables (S, H*D), pair-interleaved, sign folded into sin
    cos = cos_full[:S, : D // 2].astype(jnp.float32)            # (S, D/2)
    sin = sin_full[:S, : D // 2].astype(jnp.float32)
    cos_i = jnp.repeat(cos, 2, axis=-1)                          # c0 c0 c1 c1 ...
    sin_i = jnp.repeat(sin, 2, axis=-1)                          # s0 s0 s1 s1 ...
    pair_sign = jnp.tile(jnp.array([-1.0, 1.0], jnp.float32), D // 2)   # (D,)
    sin_i = sin_i * pair_sign                                    # -s0 +s0 -s1 +s1 ...
    cos_t = jnp.tile(cos_i, (1, H))                              # (S, H*D)
    sin_t = jnp.tile(sin_i, (1, H))                              # (S, H*D)

    TS = _choose_seq_tile(S, HD, itemsize)
    n_s = pl.cdiv(S, TS)

    bytes_x = B * S * HD * itemsize
    cost = pl.CostEstimate(
        flops=6 * B * S * HD,
        transcendentals=0,
        bytes_accessed=2 * bytes_x + 2 * S * HD * 4,
    )

    out2 = pl.pallas_call(
        _rope_kernel,
        out_shape=jax.ShapeDtypeStruct((B, S, HD), dtype),
        # Sequence tiles outer, batch inner -> the cos/sin blocks (index only
        # depends on the sequence tile) are reused across the batch loop.
        grid=(n_s, B),
        in_specs=[
            pl.BlockSpec((None, TS, HD), lambda s, b: (b, s, 0)),   # x (lane-dense H*D)
            pl.BlockSpec((TS, HD), lambda s, b: (s, 0)),            # cos table
            pl.BlockSpec((TS, HD), lambda s, b: (s, 0)),            # signed sin table
        ],
        out_specs=pl.BlockSpec((None, TS, HD), lambda s, b: (b, s, 0)),
        input_output_aliases={0: 0},   # write rotated result back into x's buffer
        compiler_params=pltpu.CompilerParams(
            dimension_semantics=("parallel", "parallel"),
        ),
        cost_estimate=cost,
    )(x2, cos_t, sin_t)

    return out2.reshape(B, S, H, D)    # free reshape back


def rotary_embedding_ref(x, cos_full, sin_full):
    """Pure-JAX reference mirroring the PyTorch complex-multiply semantics."""
    B, S, H, D = x.shape
    Dh = D // 2
    xp = x.astype(jnp.float32).reshape(B, S, H, Dh, 2)
    xr, xi = xp[..., 0], xp[..., 1]
    cos = cos_full[:S, :Dh][None, :, None, :]
    sin = sin_full[:S, :Dh][None, :, None, :]
    out_r = xr * cos - xi * sin
    out_i = xr * sin + xi * cos
    return jnp.stack([out_r, out_i], axis=-1).reshape(B, S, H, D).astype(x.dtype)


if __name__ == "__main__":
    # small shapes consistent with x: (batch, seq, num_heads, inner_dim)
    B, S, H, D = 2, 8, 4, 32
    END = 16          # self.end (>= seq_length)
    THETA = 10000.0

    key = jax.random.PRNGKey(0)
    x = jax.random.normal(key, (B, S, H, D), dtype=jnp.float32)

    cos_full, sin_full = make_freqs_cis(D, END, THETA)

    out = rotary_embedding(x, cos_full, sin_full)
    out = jax.block_until_ready(out)

    ref = rotary_embedding_ref(x, cos_full, sin_full)
    assert out.shape == (B, S, H, D)
    assert out.dtype == x.dtype
    assert jnp.allclose(out, ref, atol=1e-5, rtol=1e-5), float(jnp.max(jnp.abs(out - ref)))

    print("KERNEL_OK")
</pallas_src>

<mosaic_0001>
module attributes {stable_mosaic.version = 11 : i64} {
  func.func @_rope_kernel(%arg0: i32, %arg1: i32, %arg2: memref<1x8x128xf32, #tpu.memory_space<vmem>>, %arg3: memref<8x128xf32, #tpu.memory_space<vmem>>, %arg4: memref<8x128xf32, #tpu.memory_space<vmem>>, %arg5: memref<1x8x128xf32, #tpu.memory_space<vmem>>) attributes {dimension_semantics = [#tpu.dimension_semantics<parallel>, #tpu.dimension_semantics<parallel>], iteration_bounds = array<i64: 1, 2>, scalar_prefetch = 0 : i64, scratch_operands = 0 : i64, tpu.core_type = #tpu.core_type<tc>, window_params = [{transform_indices = @transform_0, window_bounds = array<i64: 1, 8, 128>}, {transform_indices = @transform_1, window_bounds = array<i64: 8, 128>}, {transform_indices = @transform_2, window_bounds = array<i64: 8, 128>}, {transform_indices = @transform_3, window_bounds = array<i64: 1, 8, 128>}]} {
    %c0 = arith.constant 0 : index
    %c0_0 = arith.constant 0 : index
    %c0_1 = arith.constant 0 : index
    %0 = vector.load %arg2[%c0, %c0_0, %c0_1] : memref<1x8x128xf32, #tpu.memory_space<vmem>>, vector<1x8x128xf32>
    %1 = vector.shape_cast %0 : vector<1x8x128xf32> to vector<8x128xf32>
    %2 = tpu.iota {dimensions = array<i32: 1>} : vector<8x128xi32>
    %c1_i32 = arith.constant 1 : i32
    %3 = vector.broadcast %c1_i32 : i32 to vector<8x128xi32>
    %4 = arith.andi %2, %3 : vector<8x128xi32>
    %c0_i32 = arith.constant 0 : i32
    %5 = vector.broadcast %c0_i32 : i32 to vector<8x128xi32>
    %6 = arith.cmpi eq, %4, %5 : vector<8x128xi32>
    %c1_i32_2 = arith.constant 1 : i32
    %7 = tpu.dynamic_rotate %1 by %c1_i32_2 dim 1 : vector<8x128xf32>, i32 -> vector<8x128xf32>
    %c127_i32 = arith.constant 127 : i32
    %8 = tpu.dynamic_rotate %1 by %c127_i32 dim 1 : vector<8x128xf32>, i32 -> vector<8x128xf32>
    %9 = arith.select %6, %8, %7 : vector<8x128xi1>, vector<8x128xf32>
    %c0_3 = arith.constant 0 : index
    %c0_4 = arith.constant 0 : index
    %10 = vector.load %arg3[%c0_3, %c0_4] : memref<8x128xf32, #tpu.memory_space<vmem>>, vector<8x128xf32>
    %11 = arith.mulf %1, %10 : vector<8x128xf32>
    %c0_5 = arith.constant 0 : index
    %c0_6 = arith.constant 0 : index
    %12 = vector.load %arg4[%c0_5, %c0_6] : memref<8x128xf32, #tpu.memory_space<vmem>>, vector<8x128xf32>
    %13 = arith.mulf %9, %12 : vector<8x128xf32>
    %14 = arith.addf %11, %13 : vector<8x128xf32>
    %c0_7 = arith.constant 0 : index
    %c0_8 = arith.constant 0 : index
    %c0_9 = arith.constant 0 : index
    %15 = vector.load %arg5[%c0_7, %c0_8, %c0_9] : memref<1x8x128xf32, #tpu.memory_space<vmem>>, vector<1x8x128xf32>
    %16 = vector.shape_cast %15 : vector<1x8x128xf32> to vector<8x128xf32>
    %17 = vector.shape_cast %14 : vector<8x128xf32> to vector<1x8x128xf32>
    tpu.vector_store %arg5[%c0_7, %c0_8, %c0_9], %17 {strides = array<i32>} : memref<1x8x128xf32, #tpu.memory_space<vmem>>, vector<1x8x128xf32>,
    return
  }
  func.func @transform_0(%arg0: i32, %arg1: i32) -> (i32, i32, i32) {
    %c0_i32 = arith.constant 0 : i32
    %c0_i32_0 = arith.constant 0 : i32
    return %arg1, %arg0, %c0_i32 : i32, i32, i32
  }
  func.func @transform_1(%arg0: i32, %arg1: i32) -> (i32, i32) {
    %c0_i32 = arith.constant 0 : i32
    %c0_i32_0 = arith.constant 0 : i32
    return %arg0, %c0_i32 : i32, i32
  }
  func.func @transform_2(%arg0: i32, %arg1: i32) -> (i32, i32) {
    %c0_i32 = arith.constant 0 : i32
    %c0_i32_0 = arith.constant 0 : i32
    return %arg0, %c0_i32 : i32, i32
  }
  func.func @transform_3(%arg0: i32, %arg1: i32) -> (i32, i32, i32) {
    %c0_i32 = arith.constant 0 : i32
    %c0_i32_0 = arith.constant 0 : i32
    return %arg1, %arg0, %c0_i32 : i32, i32, i32
  }
}

</mosaic_0001>

<llo_original>
// kernel: tpu_custom_call.1
$region0: #{tpu_custom_call.1}
  #allocation0 [shape = 'u32[]', space=smem, size = 0x4, offset = 0x4, fixed_abs, tag = 'smem constant byte address 0x4 - core index']
  #allocation1 [shape = 'u32[72,128]{1,0:T(1,128)}', space=vmem, size = 0x9000, scoped, tag = 'internal scratch']
  %s0 = inlined_call_operand.hbm [shape: f32[2,8,128], index: 0, kind: input, shape index: {}, may-alias: {0,3}]
  %s1 = inlined_call_operand.vmem [shape: f32[8,128], index: 1, kind: input, shape index: {}]
  %s2 = inlined_call_operand.vmem [shape: f32[8,128], index: 2, kind: input, shape index: {}]
  %s3 = inlined_call_operand.hbm [shape: f32[2,8,128], index: 3, kind: output, shape index: {}, may-alias: {0,3}]
  %s4 = sld [smem:[#allocation0]]
  $region49: #{tpu_custom_call.1} parent=0
    _
  %s6 = ssub.s32 1, %s4
  %s7 = scalar_select 0, %s6, %s4
  $region1: #{tpu_custom_call.1} parent=0
    #allocation2 [shape = 'u8[8192]{0}', space=vmem, size = 0x2000, scoped, tag = 'input window, operand 0']
    #allocation3 [shape = 's32[2]{0}', space=sflag, size = 0x8, scoped, tag = 'scoped memory for tpu_custom_call.1']
    #allocation4 [shape = 's32[2]{0}', space=sflag, size = 0x8, scoped, tag = 'scoped memory for tpu_custom_call.1']
    #allocation5 [shape = 'u8[8192]{0}', space=vmem, size = 0x2000, scoped, tag = 'output window, operand 0']
    %8 = vsyncpa [#allocation3], 0
    %s9 = scalar_lea.sflag [#allocation3], 1
    %10 = vsyncpa %s9, 0
    %11 = vsyncpa [#allocation4], 0
    %s12 = scalar_lea.sflag [#allocation4], 1
    %13 = vsyncpa %s12, 0
    loop: start=0, step=1, limit=4
    $region2: #{tpu_custom_call.1} parent=1 // loop_pre_header
      _
    $region3: #{tpu_custom_call.1} parent=1 // loop_header
      %s15 = sphi 0, %s19
      %p16 = scmp.ge.s32.totalorder %s15, 4
      %s22 = sphi 0, %s34
      %s23 = sphi 0, %s30
      %s24 = sphi 0, %s22
      %s25 = sphi 0, %s23
      %s26 = sphi 0, %s24
      %s27 = sphi 0, %s25
      %s39 = sphi 0, %s41
      %s42 = sphi 0, %s39
      %s43 = sphi 0, %s42
      %s59 = sphi 0, %s43
      %s65 = sphi 0, %s67
      %s68 = sphi 0, %s65
      %s69 = sphi 0, %s68
      %s85 = sphi 0, %s69
      %s91 = sphi 0, %s93
      %s94 = sphi 0, %s91
      %s95 = sphi 0, %s94
      %s111 = sphi 0, %s95
      %s119 = sphi 0, %s121
      %s122 = sphi 0, %s119
      %s123 = sphi 0, %s122
      %s139 = sphi 0, %s123
    $region4: #{tpu_custom_call.1} parent=1 // loop_header_branch
      %18 = sbr.rel (%p16) target = $region8
    $region5: #{tpu_custom_call.1} parent=1 // loop_body
      %s20 = ssub.s32 %s15, 1
      %s21 = ssub.s32 %s15, 2
      %s28 = sadd.s32 1, %s23
      %p29 = scmp.ge.s32.totalorder %s28, 2
      %s30 = scalar_select %p29, 0, %s28
      %s31 = sadd.s32 1, %s22
      %s32 = scalar_select %p29, %s31, %s22
      %p33 = scmp.ge.s32.totalorder %s32, 1
      %s34 = scalar_select %p33, 0, %s32
      %s35 = ssub.s32 %s23, %s30
      %s36 = ssub.s32 %s22, %s34
      %s37 = sor.u32 %s35, %s36
      %p38 = scmp.eq.s32.totalorder %s37, 0
      %s40 = sadd.s32 %s39, 1
      %s41 = scalar_select %p38, %s39, %s40
      %p44 = pneg %p38
      %p45 = scmp.eq.s32.totalorder %s15, 1
      %p46 = por %p44, %p45
      %p47 = scmp.ne.s32.totalorder %s39, %s42
      %p48 = scmp.eq.s32.totalorder %s15, 0
      %p49 = por %p47, %p48
      %p50 = scmp.ne.s32.totalorder %s39, %s42
      %p51 = scmp.eq.s32.totalorder %s20, 1
      %p52 = por %p50, %p51
      %p53 = scmp.ne.s32.totalorder %s42, %s43
      %p54 = scmp.eq.s32.totalorder %s20, 0
      %p55 = por %p53, %p54
      %p56 = scmp.ne.s32.totalorder %s42, %s43
      %p57 = scmp.eq.s32.totalorder %s21, 1
      %p58 = por %p56, %p57
      %p60 = scmp.ne.s32.totalorder %s43, %s59
      %p61 = scmp.eq.s32.totalorder %s21, 0
      %p62 = por %p60, %p61
      %s63 = ssub.s32 %s22, %s34
      %p64 = scmp.eq.s32.totalorder %s63, 0
      %s66 = sadd.s32 %s65, 1
      %s67 = scalar_select %p64, %s65, %s66
      %p70 = pneg %p64
      %p71 = scmp.eq.s32.totalorder %s15, 1
      %p72 = por %p70, %p71
      %p73 = scmp.ne.s32.totalorder %s65, %s68
      %p74 = scmp.eq.s32.totalorder %s15, 0
      %p75 = por %p73, %p74
      %p76 = scmp.ne.s32.totalorder %s65, %s68
      %p77 = scmp.eq.s32.totalorder %s20, 1
      %p78 = por %p76, %p77
      %p79 = scmp.ne.s32.totalorder %s68, %s69
      %p80 = scmp.eq.s32.totalorder %s20, 0
      %p81 = por %p79, %p80
      %p82 = scmp.ne.s32.totalorder %s68, %s69
      %p83 = scmp.eq.s32.totalorder %s21, 1
      %p84 = por %p82, %p83
      %p86 = scmp.ne.s32.totalorder %s69, %s85
      %p87 = scmp.eq.s32.totalorder %s21, 0
      %p88 = por %p86, %p87
      %s89 = ssub.s32 %s22, %s34
      %p90 = scmp.eq.s32.totalorder %s89, 0
      %s92 = sadd.s32 %s91, 1
      %s93 = scalar_select %p90, %s91, %s92
      %p96 = pneg %p90
      %p97 = scmp.eq.s32.totalorder %s15, 1
      %p98 = por %p96, %p97
      %p99 = scmp.ne.s32.totalorder %s91, %s94
      %p100 = scmp.eq.s32.totalorder %s15, 0
      %p101 = por %p99, %p100
      %p102 = scmp.ne.s32.totalorder %s91, %s94
      %p103 = scmp.eq.s32.totalorder %s20, 1
      %p104 = por %p102, %p103
      %p105 = scmp.ne.s32.totalorder %s94, %s95
      %p106 = scmp.eq.s32.totalorder %s20, 0
      %p107 = por %p105, %p106
      %p108 = scmp.ne.s32.totalorder %s94, %s95
      %p109 = scmp.eq.s32.totalorder %s21, 1
      %p110 = por %p108, %p109
      %p112 = scmp.ne.s32.totalorder %s95, %s111
      %p113 = scmp.eq.s32.totalorder %s21, 0
      %p114 = por %p112, %p113
      %s115 = ssub.s32 %s23, %s30
      %s116 = ssub.s32 %s22, %s34
      %s117 = sor.u32 %s115, %s116
      %p118 = scmp.eq.s32.totalorder %s117, 0
      %s120 = sadd.s32 %s119, 1
      %s121 = scalar_select %p118, %s119, %s120
      %p124 = pneg %p118
      %p125 = scmp.eq.s32.totalorder %s15, 1
      %p126 = por %p124, %p125
      %p127 = scmp.ne.s32.totalorder %s119, %s122
      %p128 = scmp.eq.s32.totalorder %s15, 0
      %p129 = por %p127, %p128
      %p130 = scmp.ne.s32.totalorder %s119, %s122
      %p131 = scmp.eq.s32.totalorder %s20, 1
      %p132 = por %p130, %p131
      %p133 = scmp.ne.s32.totalorder %s122, %s123
      %p134 = scmp.eq.s32.totalorder %s20, 0
      %p135 = por %p133, %p134
      %p136 = scmp.ne.s32.totalorder %s122, %s123
      %p137 = scmp.eq.s32.totalorder %s21, 1
      %p138 = por %p136, %p137
      %p140 = scmp.ne.s32.totalorder %s123, %s139
      %p141 = scmp.eq.s32.totalorder %s21, 0
      %p142 = por %p140, %p141
      %p143 = scmp.le.s32.totalorder 1, %s15
      %p144 = scmp.lt.s32.totalorder %s15, 3
      %p145 = pnand %p143, %p144
      %p146 = pneg %p145
      // Predicated region
      $region9: #{tpu_custom_call.1} parent=5 // pred_check
        _
      $region10: #{tpu_custom_call.1} parent=5 // pred_check_branch
        %148 = sbr.rel (%p145) target = $region12
      $region11: #{tpu_custom_call.1} parent=5 // pred_region
        %s149 = ssub.s32 %s15, 1
        // Predicated region
        $region13: #{tpu_custom_call.1} parent=11 // pred_check
          %p150 = pneg %p81
        $region14: #{tpu_custom_call.1} parent=11 // pred_check_branch
          %152 = sbr.rel (%p150) target = $region16
        $region15: #{tpu_custom_call.1} parent=11 // pred_region
          %p153 = scmp.lt.s32.totalorder %s24, 0
          %s154 = scalar_select %p153, %s24, 0
          %s155 = smul.addr %s154, 8
          %s156 = scalar_lea.vmem %s1, %s155
        $region16: #{tpu_custom_call.1} parent=11 // pred_fallthru
          _
        // Predicated region
        $region17: #{tpu_custom_call.1} parent=11 // pred_check
          %p157 = pneg %p107
        $region18: #{tpu_custom_call.1} parent=11 // pred_check_branch
          %159 = sbr.rel (%p157) target = $region20
        $region19: #{tpu_custom_call.1} parent=11 // pred_region
          %p160 = scmp.lt.s32.totalorder %s24, 0
          %s161 = scalar_select %p160, %s24, 0
          %s162 = smul.addr %s161, 8
          %s163 = scalar_lea.vmem %s2, %s162
        $region20: #{tpu_custom_call.1} parent=11 // pred_fallthru
          _
      $region12: #{tpu_custom_call.1} parent=5 // pred_fallthru
        _
      %p164 = scmp.lt.s32.totalorder %s15, 2
      // Predicated region
      $region21: #{tpu_custom_call.1} parent=5 // pred_check
        %p165 = pneg %p164
      $region22: #{tpu_custom_call.1} parent=5 // pred_check_branch
        %167 = sbr.rel (%p165) target = $region24
      $region23: #{tpu_custom_call.1} parent=5 // pred_region
        // Predicated region
        $region25: #{tpu_custom_call.1} parent=23 // pred_check
          %p168 = pneg %p49
        $region26: #{tpu_custom_call.1} parent=23 // pred_check_branch
          %170 = sbr.rel (%p168) target = $region28
        $region27: #{tpu_custom_call.1} parent=23 // pred_region
          %s171 = sand.u32 %s39, 1
          %s172 = scalar_lea.sflag [#allocation3], %s171
          %s173 = sand.u32 %s39, 1
          %s174 = smul.addr %s173, 8
          %s175 = scalar_lea.vmem [#allocation2], %s174
          %177 = vsyncadd %s172, 0
          %s178 = sadd.s32 %s22, %s23
          %s179 = smul.addr %s178, 8
          %s180 = scalar_lea.hbm %s0, %s179
          %s182 = sshll.u32 %s180, 4
          %s183 = int_to_ptr.hbm [resolvable:$true] %s182
          %s184 = sshll.u32 %s175, 4
          %s185 = int_to_ptr.vmem [resolvable:$true] %s184
          %187 = dma.hbm_to_vmem [thread:$0]  %s183, 128, %s185, %s172
        $region28: #{tpu_custom_call.1} parent=23 // pred_fallthru
          _
      $region24: #{tpu_custom_call.1} parent=5 // pred_fallthru
        _
      %p188 = scmp.le.s32.totalorder 1, %s15
      %p189 = scmp.lt.s32.totalorder %s15, 3
      %p190 = pnand %p188, %p189
      %p191 = pneg %p190
      // Predicated region
      $region29: #{tpu_custom_call.1} parent=5 // pred_check
        _
      $region30: #{tpu_custom_call.1} parent=5 // pred_check_branch
        %193 = sbr.rel (%p190) target = $region32
      $region31: #{tpu_custom_call.1} parent=5 // pred_region
        %s194 = ssub.s32 %s15, 1
        %s195 = sand.u32 %s42, 1
        %s196 = scalar_lea.sflag [#allocation3], %s195
        %s197 = sand.u32 %s42, 1
        %s198 = smul.addr %s197, 8
        %s199 = scalar_lea.vmem [#allocation2], %s198
        // Predicated region
        $region33: #{tpu_custom_call.1} parent=31 // pred_check
          %p200 = pneg %p55
        $region34: #{tpu_custom_call.1} parent=31 // pred_check_branch
          %202 = sbr.rel (%p200) target = $region36
        $region35: #{tpu_custom_call.1} parent=31 // pred_region
          %204 = dma.done %s196, 128
        $region36: #{tpu_custom_call.1} parent=31 // pred_fallthru
          _
        %s205 = sand.u32 %s42, 1
        %s206 = scalar_lea.sflag [#allocation3], %s205
        %s207 = sand.u32 %s42, 1
        %s208 = smul.addr %s207, 8
        %s209 = scalar_lea.vmem [#allocation2], %s208
        %p210 = pneg %p55
        %p211 = pneg %p52
        %p212 = scmp.lt.s32.totalorder %s24, 0
        %s213 = scalar_select %p212, %s24, 0
        %s214 = smul.addr %s213, 8
        %s215 = scalar_lea.vmem %s1, %s214
        %p216 = pneg %p81
        %p217 = pneg %p78
        %p218 = scmp.lt.s32.totalorder %s24, 0
        %s219 = scalar_select %p218, %s24, 0
        %s220 = smul.addr %s219, 8
        %s221 = scalar_lea.vmem %s2, %s220
        %p222 = pneg %p107
        %p223 = pneg %p104
        %p224 = pneg %p135
        %p225 = pneg %p132
        %s226 = sand.u32 %s122, 1
        %s227 = scalar_lea.sflag [#allocation4], %s226
        %s228 = sand.u32 %s122, 1
        %s229 = smul.addr %s228, 8
        %s230 = scalar_lea.vmem [#allocation5], %s229
        %p231 = scmp.lt.s32.totalorder %s24, 0
        %s232 = scalar_select %p231, %s24, 0
        %s233 = smul.addr %s232, 8
        %s234 = scalar_lea.vmem %s1, %s233
        %p235 = scmp.lt.s32.totalorder %s24, 0
        %s236 = scalar_select %p235, %s24, 0
        %s237 = smul.addr %s236, 8
        %s238 = scalar_lea.vmem %s2, %s237
        %v239 = vld [vmem:[%s199] sm:$0xff]
        %v240 = vlaneseq
        %v241 = vand.u32 %v240, 127
        %v242 = vand.u32 %v241, 1
        %vm243 = vcmp.eq.s32.totalorder %v242, 0
        %244 = vrot.lane.b32.xlu0 %v239, 1
        %v245 = vpop.permute.xlu0 %244
        %246 = vrot.lane.b32.xlu0 %v239, 127
        %v247 = vpop.permute.xlu0 %246
        %v248 = vsel %vm243, %v247, %v245
        %v249 = vld [vmem:[%s234] sm:$0xff]
        %v250 = vmul.f32 %v239, %v249
        %v251 = vld [vmem:[%s238] sm:$0xff]
        %v252 = vmul.f32 %v248, %v251
        %v253 = vadd.f32 %v250, %v252
        %254 = vst [vmem:[%s230] sm:$0xff] %v253
        %s255 = sand.u32 %s122, 1
        %s256 = scalar_lea.sflag [#allocation4], %s255
        %s257 = sand.u32 %s122, 1
        %s258 = smul.addr %s257, 8
        %s259 = scalar_lea.vmem [#allocation5], %s258
        // Predicated region
        $region37: #{tpu_custom_call.1} parent=31 // pred_check
          %p260 = pneg %p132
        $region38: #{tpu_custom_call.1} parent=31 // pred_check_branch
          %262 = sbr.rel (%p260) target = $region40
        $region39: #{tpu_custom_call.1} parent=31 // pred_region
          %264 = vsyncadd %s256, 0
          %s265 = sadd.s32 %s24, %s25
          %s266 = smul.addr %s265, 8
          %s267 = scalar_lea.hbm %s3, %s266
          %s269 = sshll.u32 %s259, 4
          %s270 = int_to_ptr.vmem [resolvable:$true] %s269
          %s271 = sshll.u32 %s267, 4
          %s272 = int_to_ptr.hbm [resolvable:$true] %s271
          %274 = dma.vmem_to_hbm [thread:$0]  %s270, 128, %s272, %s256
        $region40: #{tpu_custom_call.1} parent=31 // pred_fallthru
          _
      $region32: #{tpu_custom_call.1} parent=5 // pred_fallthru
        _
      %p275 = scmp.le.s32.totalorder 2, %s15
      // Predicated region
      $region41: #{tpu_custom_call.1} parent=5 // pred_check
        %p276 = pneg %p275
      $region42: #{tpu_custom_call.1} parent=5 // pred_check_branch
        %278 = sbr.rel (%p276) target = $region44
      $region43: #{tpu_custom_call.1} parent=5 // pred_region
        %s279 = ssub.s32 %s15, 2
        // Predicated region
        $region45: #{tpu_custom_call.1} parent=43 // pred_check
          %p280 = pneg %p138
        $region46: #{tpu_custom_call.1} parent=43 // pred_check_branch
          %282 = sbr.rel (%p280) target = $region48
        $region47: #{tpu_custom_call.1} parent=43 // pred_region
          %s283 = sand.u32 %s123, 1
          %s284 = scalar_lea.sflag [#allocation4], %s283
          %s285 = sand.u32 %s123, 1
          %s286 = smul.addr %s285, 8
          %s287 = scalar_lea.vmem [#allocation5], %s286
          %289 = dma.done %s284, 128
        $region48: #{tpu_custom_call.1} parent=43 // pred_fallthru
          _
      $region44: #{tpu_custom_call.1} parent=5 // pred_fallthru
        _
    $region6: #{tpu_custom_call.1} parent=1 // loop_footer
      %s19 = sadd.s32 1, %s15
    $region7: #{tpu_custom_call.1} parent=1 // loop_footer_branch
      %14 = sbr.rel target = $region3
    $region8: #{tpu_custom_call.1} parent=1 // loop_exit
      _
    %290 = vsyncpa [#allocation3], 1
    %s291 = scalar_lea.sflag [#allocation3], 1
    %292 = vsyncpa %s291, 1
    %293 = vsyncpa [#allocation4], 1
    %s294 = scalar_lea.sflag [#allocation4], 1
    %295 = vsyncpa %s294, 1

</llo_original>
